<compile_context>
chip_gen: v5e
topology: v5e:2x2
jax: 0.10.0
libtpu: 0.0.40
codegen_flags: <defaults>
</compile_context>

<pallas_src>
import functools

import jax
import jax.numpy as jnp
from jax.experimental import pallas as pl
from jax.experimental.pallas import tpu as pltpu


def _round_up(x, m):
    return (x + m - 1) // m * m


# ---------------------------------------------------------------------------
# Path A (small/medium graphs): fully-MXU kernel on a channel-stacked layout.
# ---------------------------------------------------------------------------
def mixprop_kron_kernel(a_ref, w_ref, b_ref, x_ref, o_ref, *,
                        gdep, alpha, matmul_dtype):
    """All-MXU MixProp pixel tile.

    a_ref : (CN, CN)            kron(I_cin, (1-alpha)*A_norm), matmul_dtype, resident
    w_ref : (gdep+1, CO_N, CN)  kron(W_k, I_N) 1x1-conv weights, f32, resident
    b_ref : (CO_N, 1)           bias broadcast over nodes, f32, resident
    x_ref : (CN, TP)            channel-stacked pixel tile (rows = ci*N + v), f32
    o_ref : (CO_N, TP)          channel-stacked output tile (rows = co*N + v), f32
    """
    x = x_ref[...]                                   # (CN, TP) f32
    a = a_ref[...]                                   # (CN, CN)
    ax = alpha * x                                   # hoisted residual term
    h = x                                            # hop 0
    # Hop-0 contribution of the fused 1x1 conv (also initialises the accumulator).
    acc = jnp.dot(w_ref[0], h, preferred_element_type=jnp.float32)
    for k in range(1, gdep + 1):                     # static unroll, gdep tiny
        # h_k = alpha*x + (1-alpha)*A @ h_{k-1}; (1-alpha) folded into `a`.
        h = ax + jnp.dot(a, h.astype(matmul_dtype),
                         preferred_element_type=jnp.float32)
        acc = acc + jnp.dot(w_ref[k], h, preferred_element_type=jnp.float32)
    o_ref[...] = (acc + b_ref[...]).astype(o_ref.dtype)


# ---------------------------------------------------------------------------
# Path B (large graphs fallback): per-channel MXU propagation + VPU 1x1 conv.
# ---------------------------------------------------------------------------
def mixprop_channel_kernel(a_ref, w_ref, b_ref, x_ref, o_ref, *,
                           gdep, alpha, matmul_dtype):
    """Per-channel MixProp pixel tile.

    a_ref : (N, N)          (1-alpha)*A_norm, matmul_dtype, resident
    w_ref : (c_out, K)      SMEM scalars, K = (gdep+1)*c_in
    b_ref : (c_out,)        SMEM
    x_ref : (c_in, N, TP)   f32
    o_ref : (c_out, N, TP)  f32
    """
    c_in, n, tp = x_ref.shape
    c_out = o_ref.shape[0]

    a = a_ref[...]
    x = [x_ref[ci] for ci in range(c_in)]
    ax = [alpha * x[ci] for ci in range(c_in)]       # hoisted residual terms
    h = list(x)
    acc = [jnp.zeros((n, tp), jnp.float32) for _ in range(c_out)]

    for k in range(gdep + 1):                        # static Python loops
        if k > 0:
            h = [ax[ci] + jnp.dot(a, h[ci].astype(matmul_dtype),
                                  preferred_element_type=jnp.float32)
                 for ci in range(c_in)]
        for ci in range(c_in):
            kc = k * c_in + ci
            for co in range(c_out):
                acc[co] = acc[co] + w_ref[co, kc] * h[ci]

    for co in range(c_out):
        o_ref[co] = (acc[co] + b_ref[co]).astype(o_ref.dtype)


# ---------------------------------------------------------------------------
# Wrapper
# ---------------------------------------------------------------------------
@functools.partial(jax.jit, static_argnames=(
    "gdep", "alpha", "pixel_tile", "use_bf16_matmul", "use_kron",
    "kron_vmem_budget"))
def mixprop_forward(x, adj, weight, bias, *, gdep, alpha,
                    pixel_tile=1024, use_bf16_matmul=True, use_kron=None,
                    kron_vmem_budget=8 * 1024 * 1024):
    """MixProp forward: x (B, c_in, N, T), adj (N, N) -> (B, c_out, N, T)."""
    B, c_in, N, T = x.shape
    c_out, K = weight.shape
    assert K == (gdep + 1) * c_in
    BT = B * T

    matmul_dtype = jnp.bfloat16 if use_bf16_matmul else jnp.float32

    # Hoisted adjacency normalization (exact PyTorch semantics: unguarded
    # row-sum divide), pre-scaled by (1 - alpha) so the hop update is a single
    # matmul + residual.
    a = adj.astype(jnp.float32) + jnp.eye(N, dtype=jnp.float32)
    a = a / jnp.sum(a, axis=1, keepdims=True)
    a = (1.0 - alpha) * a

    # Pad nodes to a sublane multiple and pixels (lanes) to a 128 multiple.
    N_pad = _round_up(N, 8)
    TP = _round_up(min(pixel_tile, _round_up(BT, 128)), 128)
    # Keep the double-buffered in+out tiles within a VMEM budget.
    while TP > 128 and 8 * (c_in + c_out) * N_pad * TP > 20 * 1024 * 1024:
        TP = max(128, _round_up(TP // 2, 128))
    BT_pad = _round_up(BT, TP)
    grid = (BT_pad // TP,)

    CN = c_in * N_pad
    CO_N = c_out * N_pad
    if use_kron is None:
        kron_bytes = 4 * (CN * CN + (gdep + 1) * CO_N * CN + CO_N)
        use_kron = kron_bytes <= kron_vmem_budget

    a_pad = jnp.pad(a, ((0, N_pad - N), (0, N_pad - N)))

    # Layout glue: (B, c_in, N, T) -> (c_in, N, B*T); pixel axis on lanes.
    x3 = jnp.transpose(x, (1, 2, 0, 3)).reshape(c_in, N, BT)
    x3 = jnp.pad(x3, ((0, 0), (0, N_pad - N), (0, BT_pad - BT)))

    flops = int(2 * gdep * c_in * N * N * BT_pad             # propagation matmuls
                + 2 * (gdep + 1) * c_in * c_out * N * BT_pad  # fused 1x1 conv
                + 2 * gdep * c_in * N * BT_pad)               # residual adds
    bytes_accessed = int(4 * (c_in + c_out) * N_pad * BT_pad
                         + 4 * (N_pad * N_pad + weight.size + bias.size))

    cparams = pltpu.CompilerParams(
        dimension_semantics=("parallel",),
        vmem_limit_bytes=32 * 1024 * 1024)
    cost = pl.CostEstimate(flops=flops, transcendentals=0,
                           bytes_accessed=bytes_accessed)

    if use_kron:
        # Fold the channel dim into the sublane (node) dim so both the graph
        # propagation and the 1x1 conv become single MXU matmuls per hop.
        a_block = jnp.kron(jnp.eye(c_in, dtype=jnp.float32),
                           a_pad).astype(matmul_dtype)            # (CN, CN)
        eye_n = jnp.eye(N_pad, dtype=jnp.float32)
        w_blocks = jnp.stack(
            [jnp.kron(weight[:, k * c_in:(k + 1) * c_in].astype(jnp.float32),
                      eye_n)
             for k in range(gdep + 1)])                           # (gdep+1, CO_N, CN)
        b_col = jnp.repeat(bias.astype(jnp.float32), N_pad).reshape(CO_N, 1)
        x2 = x3.reshape(CN, BT_pad)

        out2 = pl.pallas_call(
            functools.partial(mixprop_kron_kernel, gdep=gdep,
                              alpha=float(alpha), matmul_dtype=matmul_dtype),
            out_shape=jax.ShapeDtypeStruct((CO_N, BT_pad), jnp.float32),
            grid=grid,
            in_specs=[
                pl.BlockSpec((CN, CN), lambda i: (0, 0)),              # resident
                pl.BlockSpec((gdep + 1, CO_N, CN), lambda i: (0, 0, 0)),
                pl.BlockSpec((CO_N, 1), lambda i: (0, 0)),
                pl.BlockSpec((CN, TP), lambda i: (0, i)),              # pixel tile
            ],
            out_specs=pl.BlockSpec((CO_N, TP), lambda i: (0, i)),
            compiler_params=cparams,
            cost_estimate=cost,
        )(a_block, w_blocks, b_col, x2)
        out3 = out2.reshape(c_out, N_pad, BT_pad)
    else:
        # Fallback for large graphs where the kron-structured operands would
        # blow past the VMEM budget.
        out3 = pl.pallas_call(
            functools.partial(mixprop_channel_kernel, gdep=gdep,
                              alpha=float(alpha), matmul_dtype=matmul_dtype),
            out_shape=jax.ShapeDtypeStruct((c_out, N_pad, BT_pad), jnp.float32),
            grid=grid,
            in_specs=[
                pl.BlockSpec((N_pad, N_pad), lambda i: (0, 0)),        # resident
                pl.BlockSpec(memory_space=pltpu.MemorySpace.SMEM),     # weight
                pl.BlockSpec(memory_space=pltpu.MemorySpace.SMEM),     # bias
                pl.BlockSpec((c_in, N_pad, TP), lambda i: (0, 0, i)),  # pixel tile
            ],
            out_specs=pl.BlockSpec((c_out, N_pad, TP), lambda i: (0, 0, i)),
            compiler_params=cparams,
            cost_estimate=cost,
        )(a_pad.astype(matmul_dtype), weight.astype(jnp.float32),
          bias.astype(jnp.float32), x3)

    # Drop node/pixel padding and restore the PyTorch NCHW convention.
    out = out3[:, :N, :BT].reshape(c_out, N, B, T)
    return jnp.transpose(out, (2, 0, 1, 3))                 # (B, c_out, N, T)


def mixprop_reference(x, adj, weight, bias, *, gdep, alpha):
    """Pure-JAX reference mirroring the PyTorch forward exactly."""
    n = adj.shape[0]
    adj = adj + jnp.eye(n, dtype=adj.dtype)
    d = adj.sum(1)
    a = adj / d[:, None]
    h = x
    out = [h]
    for _ in range(gdep):
        h = alpha * x + (1.0 - alpha) * jnp.einsum('ncwl,vw->ncvl', h, a)
        out.append(h)
    ho = jnp.concatenate(out, axis=1)
    return jnp.einsum('bknt,ok->bont', ho, weight) + bias[None, :, None, None]


if __name__ == "__main__":
    B, c_in, N, T = 2, 4, 16, 8
    gdep, alpha, c_out = 2, 0.05, 6

    key = jax.random.PRNGKey(0)
    kx, ka, kw, kb = jax.random.split(key, 4)
    x = jax.random.normal(kx, (B, c_in, N, T), dtype=jnp.float32)
    # Non-negative adjacency so row degrees (after +I) are well away from 0.
    adj = jnp.abs(jax.random.normal(ka, (N, N), dtype=jnp.float32))
    weight = 0.1 * jax.random.normal(kw, (c_out, (gdep + 1) * c_in),
                                     dtype=jnp.float32)
    bias = 0.1 * jax.random.normal(kb, (c_out,), dtype=jnp.float32)

    ref = mixprop_reference(x, adj, weight, bias, gdep=gdep, alpha=alpha)

    # f32 MXU path: tight check of the fused all-matmul formulation.
    out_f32 = jax.block_until_ready(
        mixprop_forward(x, adj, weight, bias, gdep=gdep, alpha=alpha,
                        use_bf16_matmul=False))
    assert out_f32.shape == (B, c_out, N, T), out_f32.shape
    assert jnp.allclose(out_f32, ref, atol=5e-4, rtol=5e-4), (
        float(jnp.max(jnp.abs(out_f32 - ref))))

    # bf16-input MXU path (default; the v6e/v7x perf configuration).
    out_bf16 = jax.block_until_ready(
        mixprop_forward(x, adj, weight, bias, gdep=gdep, alpha=alpha))
    assert out_bf16.shape == (B, c_out, N, T), out_bf16.shape
    assert jnp.allclose(out_bf16, ref, atol=2e-2, rtol=2e-2), (
        float(jnp.max(jnp.abs(out_bf16 - ref))))

    # Larger case: multi-tile pixel grid (256 pixels, 2 tiles of 128 lanes).
    B2, T2 = 4, 64
    xb = jax.random.normal(kx, (B2, c_in, N, T2), dtype=jnp.float32)
    ref2 = mixprop_reference(xb, adj, weight, bias, gdep=gdep, alpha=alpha)
    out2 = jax.block_until_ready(
        mixprop_forward(xb, adj, weight, bias, gdep=gdep, alpha=alpha,
                        pixel_tile=128))
    assert jnp.allclose(out2, ref2, atol=2e-2, rtol=2e-2), (
        float(jnp.max(jnp.abs(out2 - ref2))))

    # Exercise the per-channel fallback path (used for large graphs) as well.
    out2_ch = jax.block_until_ready(
        mixprop_forward(xb, adj, weight, bias, gdep=gdep, alpha=alpha,
                        pixel_tile=128, use_kron=False))
    assert jnp.allclose(out2_ch, ref2, atol=2e-2, rtol=2e-2), (
        float(jnp.max(jnp.abs(out2_ch - ref2))))

    print("KERNEL_OK")
</pallas_src>

<mosaic_0001>
module attributes {stable_mosaic.version = 11 : i64} {
  func.func @mixprop_kron_kernel(%arg0: i32, %arg1: memref<64x64xf32, #tpu.memory_space<vmem>>, %arg2: memref<3x96x64xf32, #tpu.memory_space<vmem>>, %arg3: memref<96x1xf32, #tpu.memory_space<vmem>>, %arg4: memref<64x128xf32, #tpu.memory_space<vmem>>, %arg5: memref<96x128xf32, #tpu.memory_space<vmem>>) attributes {dimension_semantics = [#tpu.dimension_semantics<parallel>], iteration_bounds = array<i64: 1>, scalar_prefetch = 0 : i64, scratch_operands = 0 : i64, tpu.core_type = #tpu.core_type<tc>, window_params = [{pipeline_mode = #tpu.pipeline_mode<synchronous>, transform_indices = @transform_0, window_bounds = array<i64: 64, 64>}, {pipeline_mode = #tpu.pipeline_mode<synchronous>, transform_indices = @transform_1, window_bounds = array<i64: 3, 96, 64>}, {pipeline_mode = #tpu.pipeline_mode<synchronous>, transform_indices = @transform_2, window_bounds = array<i64: 96, 1>}, {transform_indices = @transform_3, window_bounds = array<i64: 64, 128>}, {transform_indices = @transform_4, window_bounds = array<i64: 96, 128>}]} {
    %c0 = arith.constant 0 : index
    %c0_0 = arith.constant 0 : index
    %0 = vector.load %arg4[%c0, %c0_0] : memref<64x128xf32, #tpu.memory_space<vmem>>, vector<64x128xf32>
    %c0_1 = arith.constant 0 : index
    %c0_2 = arith.constant 0 : index
    %1 = vector.load %arg1[%c0_1, %c0_2] : memref<64x64xf32, #tpu.memory_space<vmem>>, vector<64x64xf32>
    %cst = arith.constant 5.000000e-02 : f32
    %2 = vector.broadcast %cst : f32 to vector<64x128xf32>
    %3 = arith.mulf %2, %0 : vector<64x128xf32>
    %c0_3 = arith.constant 0 : index
    %c0_4 = arith.constant 0 : index
    %c0_5 = arith.constant 0 : index
    %4 = vector.load %arg2[%c0_3, %c0_4, %c0_5] : memref<3x96x64xf32, #tpu.memory_space<vmem>>, vector<1x96x64xf32>
    %5 = vector.shape_cast %4 : vector<1x96x64xf32> to vector<96x64xf32>
    %cst_6 = arith.constant dense<0.000000e+00> : vector<96x128xf32>
    %6 = tpu.matmul %5, %0, %cst_6 {dimension_numbers = #tpu.dot_dimension_numbers<[1], [0], [0], [1], [0, 0, 1, 1], [], []>} : vector<96x64xf32>, vector<64x128xf32>, vector<96x128xf32> -> vector<96x128xf32>
    %cst_7 = arith.constant dense<0.000000e+00> : vector<64x128xf32>
    %7 = tpu.matmul %1, %0, %cst_7 {dimension_numbers = #tpu.dot_dimension_numbers<[1], [0], [0], [1], [0, 0, 1, 1], [], []>} : vector<64x64xf32>, vector<64x128xf32>, vector<64x128xf32> -> vector<64x128xf32>
    %8 = arith.addf %3, %7 : vector<64x128xf32>
    %c1 = arith.constant 1 : index
    %c0_8 = arith.constant 0 : index
    %c0_9 = arith.constant 0 : index
    %9 = vector.load %arg2[%c1, %c0_8, %c0_9] : memref<3x96x64xf32, #tpu.memory_space<vmem>>, vector<1x96x64xf32>
    %10 = vector.shape_cast %9 : vector<1x96x64xf32> to vector<96x64xf32>
    %cst_10 = arith.constant dense<0.000000e+00> : vector<96x128xf32>
    %11 = tpu.matmul %10, %8, %cst_10 {dimension_numbers = #tpu.dot_dimension_numbers<[1], [0], [0], [1], [0, 0, 1, 1], [], []>} : vector<96x64xf32>, vector<64x128xf32>, vector<96x128xf32> -> vector<96x128xf32>
    %12 = arith.addf %6, %11 : vector<96x128xf32>
    %cst_11 = arith.constant dense<0.000000e+00> : vector<64x128xf32>
    %13 = tpu.matmul %1, %8, %cst_11 {dimension_numbers = #tpu.dot_dimension_numbers<[1], [0], [0], [1], [0, 0, 1, 1], [], []>} : vector<64x64xf32>, vector<64x128xf32>, vector<64x128xf32> -> vector<64x128xf32>
    %14 = arith.addf %3, %13 : vector<64x128xf32>
    %c2 = arith.constant 2 : index
    %c0_12 = arith.constant 0 : index
    %c0_13 = arith.constant 0 : index
    %15 = vector.load %arg2[%c2, %c0_12, %c0_13] : memref<3x96x64xf32, #tpu.memory_space<vmem>>, vector<1x96x64xf32>
    %16 = vector.shape_cast %15 : vector<1x96x64xf32> to vector<96x64xf32>
    %cst_14 = arith.constant dense<0.000000e+00> : vector<96x128xf32>
    %17 = tpu.matmul %16, %14, %cst_14 {dimension_numbers = #tpu.dot_dimension_numbers<[1], [0], [0], [1], [0, 0, 1, 1], [], []>} : vector<96x64xf32>, vector<64x128xf32>, vector<96x128xf32> -> vector<96x128xf32>
    %18 = arith.addf %12, %17 : vector<96x128xf32>
    %c0_15 = arith.constant 0 : index
    %c0_16 = arith.constant 0 : index
    %19 = vector.load %arg3[%c0_15, %c0_16] : memref<96x1xf32, #tpu.memory_space<vmem>>, vector<96x1xf32>
    %20 = vector.broadcast %19 : vector<96x1xf32> to vector<96x128xf32>
    %21 = arith.addf %18, %20 : vector<96x128xf32>
    %c0_17 = arith.constant 0 : index
    %c0_18 = arith.constant 0 : index
    %22 = vector.load %arg5[%c0_17, %c0_18] : memref<96x128xf32, #tpu.memory_space<vmem>>, vector<96x128xf32>
    tpu.vector_store %arg5[%c0_17, %c0_18], %21 {strides = array<i32>} : memref<96x128xf32, #tpu.memory_space<vmem>>, vector<96x128xf32>,
    return
  }
  func.func @transform_0(%arg0: i32) -> (i32, i32) {
    %c0_i32 = arith.constant 0 : i32
    %c0_i32_0 = arith.constant 0 : i32
    %c0_i32_1 = arith.constant 0 : i32
    return %c0_i32, %c0_i32_0 : i32, i32
  }
  func.func @transform_1(%arg0: i32) -> (i32, i32, i32) {
    %c0_i32 = arith.constant 0 : i32
    %c0_i32_0 = arith.constant 0 : i32
    %c0_i32_1 = arith.constant 0 : i32
    %c0_i32_2 = arith.constant 0 : i32
    return %c0_i32, %c0_i32_0, %c0_i32_1 : i32, i32, i32
  }
  func.func @transform_2(%arg0: i32) -> (i32, i32) {
    %c0_i32 = arith.constant 0 : i32
    %c0_i32_0 = arith.constant 0 : i32
    %c0_i32_1 = arith.constant 0 : i32
    return %c0_i32, %c0_i32_0 : i32, i32
  }
  func.func @transform_3(%arg0: i32) -> (i32, i32) {
    %c0_i32 = arith.constant 0 : i32
    %c0_i32_0 = arith.constant 0 : i32
    return %c0_i32, %arg0 : i32, i32
  }
  func.func @transform_4(%arg0: i32) -> (i32, i32) {
    %c0_i32 = arith.constant 0 : i32
    %c0_i32_0 = arith.constant 0 : i32
    return %c0_i32, %arg0 : i32, i32
  }
}

</mosaic_0001>

<llo_original>
// kernel: mixprop_forward.1
$region0: #{mixprop_forward.1}
  #allocation0 [shape = 'u32[]', space=smem, size = 0x4, offset = 0x4, fixed_abs, tag = 'smem constant byte address 0x4 - core index']
  #allocation1 [shape = 'u32[72,128]{1,0:T(1,128)}', space=vmem, size = 0x9000, scoped, tag = 'internal scratch']
  %s0 = inlined_call_operand.vmem [shape: f32[64,64], index: 0, kind: input, shape index: {}]
  %s1 = inlined_call_operand.vmem [shape: f32[3,96,64], index: 1, kind: input, shape index: {}]
  %s2 = inlined_call_operand.vmem [shape: f32[96,1], index: 2, kind: input, shape index: {}]
  %s3 = inlined_call_operand.vmem [shape: f32[64,128], index: 3, kind: input, shape index: {}]
  %s4 = inlined_call_operand.vmem [shape: f32[96,128], index: 4, kind: output, shape index: {}]
  %s5 = sld [smem:[#allocation0]]
  $region26: #{mixprop_forward.1} parent=0
    _
  %s7 = ssub.s32 1, %s5
  %s8 = scalar_select 0, %s7, %s5
  // Predicated region
  $region2: #{mixprop_forward.1} parent=0 // pred_check
    _
  $region3: #{mixprop_forward.1} parent=0 // pred_check_branch
    %10 = sbr.rel (0) target = $region5
  $region4: #{mixprop_forward.1} parent=0 // pred_region
    _
  $region5: #{mixprop_forward.1} parent=0 // pred_fallthru
    _
  // Predicated region
  $region6: #{mixprop_forward.1} parent=0 // pred_check
    _
  $region7: #{mixprop_forward.1} parent=0 // pred_check_branch
    %12 = sbr.rel (0) target = $region9
  $region8: #{mixprop_forward.1} parent=0 // pred_region
    _
  $region9: #{mixprop_forward.1} parent=0 // pred_fallthru
    _
  // Predicated region
  $region10: #{mixprop_forward.1} parent=0 // pred_check
    _
  $region11: #{mixprop_forward.1} parent=0 // pred_check_branch
    %14 = sbr.rel (0) target = $region13
  $region12: #{mixprop_forward.1} parent=0 // pred_region
    _
  $region13: #{mixprop_forward.1} parent=0 // pred_fallthru
    _
  // Predicated region
  $region14: #{mixprop_forward.1} parent=0 // pred_check
    _
  $region15: #{mixprop_forward.1} parent=0 // pred_check_branch
    %16 = sbr.rel (0) target = $region17
  $region16: #{mixprop_forward.1} parent=0 // pred_region
    _
  $region17: #{mixprop_forward.1} parent=0 // pred_fallthru
    _
  %v17 = vld [vmem:[%s3] sm:$0xff]
  %v18 = vld [vmem:[%s3 + $0x8] sm:$0xff]
  %v19 = vld [vmem:[%s3 + $0x10] sm:$0xff]
  %v20 = vld [vmem:[%s3 + $0x18] sm:$0xff]
  %v21 = vld [vmem:[%s3 + $0x20] sm:$0xff]
  %v22 = vld [vmem:[%s3 + $0x28] sm:$0xff]
  %v23 = vld [vmem:[%s3 + $0x30] sm:$0xff]
  %v24 = vld [vmem:[%s3 + $0x38] sm:$0xff]
  %v25 = vld [vmem:[%s0] sm:$0xff]
  %v26 = vld [vmem:[%s0 + $0x8] sm:$0xff]
  %v27 = vld [vmem:[%s0 + $0x10] sm:$0xff]
  %v28 = vld [vmem:[%s0 + $0x18] sm:$0xff]
  %v29 = vld [vmem:[%s0 + $0x20] sm:$0xff]
  %v30 = vld [vmem:[%s0 + $0x28] sm:$0xff]
  %v31 = vld [vmem:[%s0 + $0x30] sm:$0xff]
  %v32 = vld [vmem:[%s0 + $0x38] sm:$0xff]
  %v33 = vmul.f32 %v17, 0.05
  %v34 = vmul.f32 %v18, 0.05
  %v35 = vmul.f32 %v19, 0.05
  %v36 = vmul.f32 %v20, 0.05
  %v37 = vmul.f32 %v21, 0.05
  %v38 = vmul.f32 %v22, 0.05
  %v39 = vmul.f32 %v23, 0.05
  %v40 = vmul.f32 %v24, 0.05
  %v41 = vld [vmem:[%s1] sm:$0xff]
  %v42 = vld [vmem:[%s1 + $0x8] sm:$0xff]
  %v43 = vld [vmem:[%s1 + $0x10] sm:$0xff]
  %v44 = vld [vmem:[%s1 + $0x18] sm:$0xff]
  %v45 = vld [vmem:[%s1 + $0x20] sm:$0xff]
  %v46 = vld [vmem:[%s1 + $0x28] sm:$0xff]
  %v47 = vld [vmem:[%s1 + $0x30] sm:$0xff]
  %v48 = vld [vmem:[%s1 + $0x38] sm:$0xff]
  %v49 = vld [vmem:[%s1 + $0x40] sm:$0xff]
  %v50 = vld [vmem:[%s1 + $0x48] sm:$0xff]
  %v51 = vld [vmem:[%s1 + $0x50] sm:$0xff]
  %v52 = vld [vmem:[%s1 + $0x58] sm:$0xff]
  %vm53 = vcmask 523264
  %v55 = vsel %vm53, %v25, 0
  %v58 = vsel %vm53, %v26, 0
  %v61 = vsel %vm53, %v27, 0
  %v64 = vsel %vm53, %v28, 0
  %v67 = vsel %vm53, %v29, 0
  %v70 = vsel %vm53, %v30, 0
  %v73 = vsel %vm53, %v31, 0
  %v76 = vsel %vm53, %v32, 0
  %78 = vmatpush.msra.mxu0 0.0
  %79 = vmatpush.msra.mxu0 0.0
  %80 = vmatpush.msra.mxu0 0.0
  %81 = vmatpush.msra.mxu0 0.0
  %82 = vmatpush.msra.mxu0 0.0
  %83 = vmatpush.msra.mxu0 0.0
  %84 = vmatpush.msra.mxu0 0.0
  %85 = vmatpush.msra.mxu0 0.0
  %86 = vmatpush.msra.mxu0 %v24
  %87 = vmatpush.msra.mxu0 %v23
  %88 = vmatpush.msra.mxu0 %v22
  %89 = vmatpush.msra.mxu0 %v21
  %90 = vmatpush.msra.mxu0 %v20
  %91 = vmatpush.msra.mxu0 %v19
  %92 = vmatpush.msra.mxu0 %v18
  %93 = vmatpush.msra.mxu0 %v17
  %94 = vmatmul.f32.gmra.mxu0 %v55
  %v95 = vpop.f32.mrf.mxu0
  %v96 = vadd.f32 0.0, %v95
  %97 = vmatmul.f32.gmra.mxu0 %v58
  %v98 = vpop.f32.mrf.mxu0
  %v99 = vadd.f32 0.0, %v98
  %100 = vmatmul.f32.gmra.mxu0 %v61
  %v101 = vpop.f32.mrf.mxu0
  %v102 = vadd.f32 0.0, %v101
  %103 = vmatmul.f32.gmra.mxu0 %v64
  %v104 = vpop.f32.mrf.mxu0
  %v105 = vadd.f32 0.0, %v104
  %106 = vmatmul.f32.gmra.mxu0 %v67
  %v107 = vpop.f32.mrf.mxu0
  %v108 = vadd.f32 0.0, %v107
  %109 = vmatmul.f32.gmra.mxu0 %v70
  %v110 = vpop.f32.mrf.mxu0
  %v111 = vadd.f32 0.0, %v110
  %112 = vmatmul.f32.gmra.mxu0 %v73
  %v113 = vpop.f32.mrf.mxu0
  %v114 = vadd.f32 0.0, %v113
  %115 = vmatmul.f32.gmra.mxu0 %v76
  %v116 = vpop.f32.mrf.mxu0
  %v117 = vadd.f32 0.0, %v116
  %118 = vdwg.mxu0
  %v119 = vadd.f32 %v33, %v96
  %v120 = vadd.f32 %v34, %v99
  %v121 = vadd.f32 %v35, %v102
  %v122 = vadd.f32 %v36, %v105
  %v123 = vadd.f32 %v37, %v108
  %v124 = vadd.f32 %v38, %v111
  %v125 = vadd.f32 %v39, %v114
  %v126 = vadd.f32 %v40, %v117
  %s127 = scalar_lea.vmem %s1, 96
  %v128 = vld [vmem:[%s127] sm:$0xff]
  %v129 = vld [vmem:[%s127 + $0x8] sm:$0xff]
  %v130 = vld [vmem:[%s127 + $0x10] sm:$0xff]
  %v131 = vld [vmem:[%s127 + $0x18] sm:$0xff]
  %v132 = vld [vmem:[%s127 + $0x20] sm:$0xff]
  %v133 = vld [vmem:[%s127 + $0x28] sm:$0xff]
  %v134 = vld [vmem:[%s127 + $0x30] sm:$0xff]
  %v135 = vld [vmem:[%s127 + $0x38] sm:$0xff]
  %v136 = vld [vmem:[%s127 + $0x40] sm:$0xff]
  %v137 = vld [vmem:[%s127 + $0x48] sm:$0xff]
  %v138 = vld [vmem:[%s127 + $0x50] sm:$0xff]
  %v139 = vld [vmem:[%s127 + $0x58] sm:$0xff]
  %v141 = vsel %vm53, %v128, 0
  %v144 = vsel %vm53, %v129, 0
  %v147 = vsel %vm53, %v130, 0
  %v150 = vsel %vm53, %v131, 0
  %v153 = vsel %vm53, %v132, 0
  %v156 = vsel %vm53, %v133, 0
  %v159 = vsel %vm53, %v134, 0
  %v162 = vsel %vm53, %v135, 0
  %v165 = vsel %vm53, %v136, 0
  %v168 = vsel %vm53, %v137, 0
  %v171 = vsel %vm53, %v138, 0
  %v174 = vsel %vm53, %v139, 0
  %176 = vmatpush.msra.mxu0 0.0
  %177 = vmatpush.msra.mxu0 0.0
  %178 = vmatpush.msra.mxu0 0.0
  %179 = vmatpush.msra.mxu0 0.0
  %180 = vmatpush.msra.mxu0 0.0
  %181 = vmatpush.msra.mxu0 0.0
  %182 = vmatpush.msra.mxu0 0.0
  %183 = vmatpush.msra.mxu0 0.0
  %184 = vmatpush.msra.mxu0 %v126
  %185 = vmatpush.msra.mxu0 %v125
  %186 = vmatpush.msra.mxu0 %v124
  %187 = vmatpush.msra.mxu0 %v123
  %188 = vmatpush.msra.mxu0 %v122
  %189 = vmatpush.msra.mxu0 %v121
  %190 = vmatpush.msra.mxu0 %v120
  %191 = vmatpush.msra.mxu0 %v119
  %192 = vmatmul.f32.gmra.mxu0 %v141
  %v193 = vpop.f32.mrf.mxu0
  %v194 = vadd.f32 0.0, %v193
  %195 = vmatmul.f32.gmra.mxu0 %v144
  %v196 = vpop.f32.mrf.mxu0
  %v197 = vadd.f32 0.0, %v196
  %198 = vmatmul.f32.gmra.mxu0 %v147
  %v199 = vpop.f32.mrf.mxu0
  %v200 = vadd.f32 0.0, %v199
  %201 = vmatmul.f32.gmra.mxu0 %v150
  %v202 = vpop.f32.mrf.mxu0
  %v203 = vadd.f32 0.0, %v202
  %204 = vmatmul.f32.gmra.mxu0 %v153
  %v205 = vpop.f32.mrf.mxu0
  %v206 = vadd.f32 0.0, %v205
  %207 = vmatmul.f32.gmra.mxu0 %v156
  %v208 = vpop.f32.mrf.mxu0
  %v209 = vadd.f32 0.0, %v208
  %210 = vmatmul.f32.gmra.mxu0 %v159
  %v211 = vpop.f32.mrf.mxu0
  %v212 = vadd.f32 0.0, %v211
  %213 = vmatmul.f32.gmra.mxu0 %v162
  %v214 = vpop.f32.mrf.mxu0
  %v215 = vadd.f32 0.0, %v214
  %216 = vmatmul.f32.gmra.mxu0 %v165
  %v217 = vpop.f32.mrf.mxu0
  %v218 = vadd.f32 0.0, %v217
  %219 = vmatmul.f32.gmra.mxu0 %v168
  %v220 = vpop.f32.mrf.mxu0
  %v221 = vadd.f32 0.0, %v220
  %222 = vmatmul.f32.gmra.mxu0 %v171
  %v223 = vpop.f32.mrf.mxu0
  %v224 = vadd.f32 0.0, %v223
  %225 = vmatmul.f32.gmra.mxu0 %v174
  %v226 = vpop.f32.mrf.mxu0
  %v227 = vadd.f32 0.0, %v226
  %228 = vdwg.mxu0
  %v230 = vsel %vm53, %v41, 0
  %v233 = vsel %vm53, %v42, 0
  %v236 = vsel %vm53, %v43, 0
  %v239 = vsel %vm53, %v44, 0
  %v242 = vsel %vm53, %v45, 0
  %v245 = vsel %vm53, %v46, 0
  %v248 = vsel %vm53, %v47, 0
  %v251 = vsel %vm53, %v48, 0
  %v254 = vsel %vm53, %v49, 0
  %v257 = vsel %vm53, %v50, 0
  %v260 = vsel %vm53, %v51, 0
  %v263 = vsel %vm53, %v52, 0
  %265 = vmatpush.msra.mxu0 0.0
  %266 = vmatpush.msra.mxu0 0.0
  %267 = vmatpush.msra.mxu0 0.0
  %268 = vmatpush.msra.mxu0 0.0
  %269 = vmatpush.msra.mxu0 0.0
  %270 = vmatpush.msra.mxu0 0.0
  %271 = vmatpush.msra.mxu0 0.0
  %272 = vmatpush.msra.mxu0 0.0
  %273 = vmatpush.msra.mxu0 %v24
  %274 = vmatpush.msra.mxu0 %v23
  %275 = vmatpush.msra.mxu0 %v22
  %276 = vmatpush.msra.mxu0 %v21
  %277 = vmatpush.msra.mxu0 %v20
  %278 = vmatpush.msra.mxu0 %v19
  %279 = vmatpush.msra.mxu0 %v18
  %280 = vmatpush.msra.mxu0 %v17
  %281 = vmatmul.f32.gmra.mxu0 %v230
  %v282 = vpop.f32.mrf.mxu0
  %v283 = vadd.f32 %v194, %v282
  %284 = vmatmul.f32.gmra.mxu0 %v233
  %v285 = vpop.f32.mrf.mxu0
  %v286 = vadd.f32 %v197, %v285
  %287 = vmatmul.f32.gmra.mxu0 %v236
  %v288 = vpop.f32.mrf.mxu0
  %v289 = vadd.f32 %v200, %v288
  %290 = vmatmul.f32.gmra.mxu0 %v239
  %v291 = vpop.f32.mrf.mxu0
  %v292 = vadd.f32 %v203, %v291
  %293 = vmatmul.f32.gmra.mxu0 %v242
  %v294 = vpop.f32.mrf.mxu0
  %v295 = vadd.f32 %v206, %v294
  %296 = vmatmul.f32.gmra.mxu0 %v245
  %v297 = vpop.f32.mrf.mxu0
  %v298 = vadd.f32 %v209, %v297
  %299 = vmatmul.f32.gmra.mxu0 %v248
  %v300 = vpop.f32.mrf.mxu0
  %v301 = vadd.f32 %v212, %v300
  %302 = vmatmul.f32.gmra.mxu0 %v251
  %v303 = vpop.f32.mrf.mxu0
  %v304 = vadd.f32 %v215, %v303
  %305 = vmatmul.f32.gmra.mxu0 %v254
  %v306 = vpop.f32.mrf.mxu0
  %v307 = vadd.f32 %v218, %v306
  %308 = vmatmul.f32.gmra.mxu0 %v257
  %v309 = vpop.f32.mrf.mxu0
  %v310 = vadd.f32 %v221, %v309
  %311 = vmatmul.f32.gmra.mxu0 %v260
  %v312 = vpop.f32.mrf.mxu0
  %v313 = vadd.f32 %v224, %v312
  %314 = vmatmul.f32.gmra.mxu0 %v263
  %v315 = vpop.f32.mrf.mxu0
  %v316 = vadd.f32 %v227, %v315
  %317 = vdwg.mxu0
  %318 = vmatpush.msra.mxu0 0.0
  %319 = vmatpush.msra.mxu0 0.0
  %320 = vmatpush.msra.mxu0 0.0
  %321 = vmatpush.msra.mxu0 0.0
  %322 = vmatpush.msra.mxu0 0.0
  %323 = vmatpush.msra.mxu0 0.0
  %324 = vmatpush.msra.mxu0 0.0
  %325 = vmatpush.msra.mxu0 0.0
  %326 = vmatpush.msra.mxu0 %v126
  %327 = vmatpush.msra.mxu0 %v125
  %328 = vmatpush.msra.mxu0 %v124
  %329 = vmatpush.msra.mxu0 %v123
  %330 = vmatpush.msra.mxu0 %v122
  %331 = vmatpush.msra.mxu0 %v121
  %332 = vmatpush.msra.mxu0 %v120
  %333 = vmatpush.msra.mxu0 %v119
  %334 = vmatmul.f32.gmra.mxu0 %v55
  %v335 = vpop.f32.mrf.mxu0
  %v336 = vadd.f32 0.0, %v335
  %337 = vmatmul.f32.gmra.mxu0 %v58
  %v338 = vpop.f32.mrf.mxu0
  %v339 = vadd.f32 0.0, %v338
  %340 = vmatmul.f32.gmra.mxu0 %v61
  %v341 = vpop.f32.mrf.mxu0
  %v342 = vadd.f32 0.0, %v341
  %343 = vmatmul.f32.gmra.mxu0 %v64
  %v344 = vpop.f32.mrf.mxu0
  %v345 = vadd.f32 0.0, %v344
  %346 = vmatmul.f32.gmra.mxu0 %v67
  %v347 = vpop.f32.mrf.mxu0
  %v348 = vadd.f32 0.0, %v347
  %349 = vmatmul.f32.gmra.mxu0 %v70
  %v350 = vpop.f32.mrf.mxu0
  %v351 = vadd.f32 0.0, %v350
  %352 = vmatmul.f32.gmra.mxu0 %v73
  %v353 = vpop.f32.mrf.mxu0
  %v354 = vadd.f32 0.0, %v353
  %355 = vmatmul.f32.gmra.mxu0 %v76
  %v356 = vpop.f32.mrf.mxu0
  %v357 = vadd.f32 0.0, %v356
  %358 = vdwg.mxu0
  %v359 = vadd.f32 %v33, %v336
  %v360 = vadd.f32 %v34, %v339
  %v361 = vadd.f32 %v35, %v342
  %v362 = vadd.f32 %v36, %v345
  %v363 = vadd.f32 %v37, %v348
  %v364 = vadd.f32 %v38, %v351
  %v365 = vadd.f32 %v39, %v354
  %v366 = vadd.f32 %v40, %v357
  %s367 = scalar_lea.vmem %s1, 192
  %v368 = vld [vmem:[%s367] sm:$0xff]
  %v369 = vld [vmem:[%s367 + $0x8] sm:$0xff]
  %v370 = vld [vmem:[%s367 + $0x10] sm:$0xff]
  %v371 = vld [vmem:[%s367 + $0x18] sm:$0xff]
  %v372 = vld [vmem:[%s367 + $0x20] sm:$0xff]
  %v373 = vld [vmem:[%s367 + $0x28] sm:$0xff]
  %v374 = vld [vmem:[%s367 + $0x30] sm:$0xff]
  %v375 = vld [vmem:[%s367 + $0x38] sm:$0xff]
  %v376 = vld [vmem:[%s367 + $0x40] sm:$0xff]
  %v377 = vld [vmem:[%s367 + $0x48] sm:$0xff]
  %v378 = vld [vmem:[%s367 + $0x50] sm:$0xff]
  %v379 = vld [vmem:[%s367 + $0x58] sm:$0xff]
  %v381 = vsel %vm53, %v368, 0
  %v384 = vsel %vm53, %v369, 0
  %v387 = vsel %vm53, %v370, 0
  %v390 = vsel %vm53, %v371, 0
  %v393 = vsel %vm53, %v372, 0
  %v396 = vsel %vm53, %v373, 0
  %v399 = vsel %vm53, %v374, 0
  %v402 = vsel %vm53, %v375, 0
  %v405 = vsel %vm53, %v376, 0
  %v408 = vsel %vm53, %v377, 0
  %v411 = vsel %vm53, %v378, 0
  %v414 = vsel %vm53, %v379, 0
  %416 = vmatpush.msra.mxu0 0.0
  %417 = vmatpush.msra.mxu0 0.0
  %418 = vmatpush.msra.mxu0 0.0
  %419 = vmatpush.msra.mxu0 0.0
  %420 = vmatpush.msra.mxu0 0.0
  %421 = vmatpush.msra.mxu0 0.0
  %422 = vmatpush.msra.mxu0 0.0
  %423 = vmatpush.msra.mxu0 0.0
  %424 = vmatpush.msra.mxu0 %v366
  %425 = vmatpush.msra.mxu0 %v365
  %426 = vmatpush.msra.mxu0 %v364
  %427 = vmatpush.msra.mxu0 %v363
  %428 = vmatpush.msra.mxu0 %v362
  %429 = vmatpush.msra.mxu0 %v361
  %430 = vmatpush.msra.mxu0 %v360
  %431 = vmatpush.msra.mxu0 %v359
  %432 = vmatmul.f32.gmra.mxu0 %v381
  %v433 = vpop.f32.mrf.mxu0
  %v434 = vadd.f32 0.0, %v433
  %435 = vmatmul.f32.gmra.mxu0 %v384
  %v436 = vpop.f32.mrf.mxu0
  %v437 = vadd.f32 0.0, %v436
  %438 = vmatmul.f32.gmra.mxu0 %v387
  %v439 = vpop.f32.mrf.mxu0
  %v440 = vadd.f32 0.0, %v439
  %441 = vmatmul.f32.gmra.mxu0 %v390
  %v442 = vpop.f32.mrf.mxu0
  %v443 = vadd.f32 0.0, %v442
  %444 = vmatmul.f32.gmra.mxu0 %v393
  %v445 = vpop.f32.mrf.mxu0
  %v446 = vadd.f32 0.0, %v445
  %447 = vmatmul.f32.gmra.mxu0 %v396
  %v448 = vpop.f32.mrf.mxu0
  %v449 = vadd.f32 0.0, %v448
  %450 = vmatmul.f32.gmra.mxu0 %v399
  %v451 = vpop.f32.mrf.mxu0
  %v452 = vadd.f32 0.0, %v451
  %453 = vmatmul.f32.gmra.mxu0 %v402
  %v454 = vpop.f32.mrf.mxu0
  %v455 = vadd.f32 0.0, %v454
  %456 = vmatmul.f32.gmra.mxu0 %v405
  %v457 = vpop.f32.mrf.mxu0
  %v458 = vadd.f32 0.0, %v457
  %459 = vmatmul.f32.gmra.mxu0 %v408
  %v460 = vpop.f32.mrf.mxu0
  %v461 = vadd.f32 0.0, %v460
  %462 = vmatmul.f32.gmra.mxu0 %v411
  %v463 = vpop.f32.mrf.mxu0
  %v464 = vadd.f32 0.0, %v463
  %465 = vmatmul.f32.gmra.mxu0 %v414
  %v466 = vpop.f32.mrf.mxu0
  %v467 = vadd.f32 0.0, %v466
  %468 = vdwg.mxu0
  %v469 = vadd.f32 %v283, %v434
  %v470 = vadd.f32 %v286, %v437
  %v471 = vadd.f32 %v289, %v440
  %v472 = vadd.f32 %v292, %v443
  %v473 = vadd.f32 %v295, %v446
  %v474 = vadd.f32 %v298, %v449
  %v475 = vadd.f32 %v301, %v452
  %v476 = vadd.f32 %v304, %v455
  %v477 = vadd.f32 %v307, %v458
  %v478 = vadd.f32 %v310, %v461
  %v479 = vadd.f32 %v313, %v464
  %v480 = vadd.f32 %v316, %v467
  %v481 = vld [vmem:[%s2] sm:$0xff]
  %v482 = vld [vmem:[%s2 + $0x8] sm:$0xff]
  %v483 = vld [vmem:[%s2 + $0x10] sm:$0xff]
  %v484 = vld [vmem:[%s2 + $0x18] sm:$0xff]
  %v485 = vld [vmem:[%s2 + $0x20] sm:$0xff]
  %v486 = vld [vmem:[%s2 + $0x28] sm:$0xff]
  %v487 = vld [vmem:[%s2 + $0x30] sm:$0xff]
  %v488 = vld [vmem:[%s2 + $0x38] sm:$0xff]
  %v489 = vld [vmem:[%s2 + $0x40] sm:$0xff]
  %v490 = vld [vmem:[%s2 + $0x48] sm:$0xff]
  %v491 = vld [vmem:[%s2 + $0x50] sm:$0xff]
  %v492 = vld [vmem:[%s2 + $0x58] sm:$0xff]
  %494 = vset.pattern.permute.xlu0 0
  %495 = vperm.xlu0 %494, %v481
  %v496 = vpop.permute.xlu0 %495
  %499 = vset.pattern.permute.xlu0 0
  %500 = vperm.xlu0 %499, %v482
  %v501 = vpop.permute.xlu0 %500
  %504 = vset.pattern.permute.xlu0 0
  %505 = vperm.xlu0 %504, %v483
  %v506 = vpop.permute.xlu0 %505
  %509 = vset.pattern.permute.xlu0 0
  %510 = vperm.xlu0 %509, %v484
  %v511 = vpop.permute.xlu0 %510
  %514 = vset.pattern.permute.xlu0 0
  %515 = vperm.xlu0 %514, %v485
  %v516 = vpop.permute.xlu0 %515
  %519 = vset.pattern.permute.xlu0 0
  %520 = vperm.xlu0 %519, %v486
  %v521 = vpop.permute.xlu0 %520
  %524 = vset.pattern.permute.xlu0 0
  %525 = vperm.xlu0 %524, %v487
  %v526 = vpop.permute.xlu0 %525
  %529 = vset.pattern.permute.xlu0 0
  %530 = vperm.xlu0 %529, %v488
  %v531 = vpop.permute.xlu0 %530
  %534 = vset.pattern.permute.xlu0 0
  %535 = vperm.xlu0 %534, %v489
  %v536 = vpop.permute.xlu0 %535
  %539 = vset.pattern.permute.xlu0 0
  %540 = vperm.xlu0 %539, %v490
  %v541 = vpop.permute.xlu0 %540
  %544 = vset.pattern.permute.xlu0 0
  %545 = vperm.xlu0 %544, %v491
  %v546 = vpop.permute.xlu0 %545
  %549 = vset.pattern.permute.xlu0 0
  %550 = vperm.xlu0 %549, %v492
  %v551 = vpop.permute.xlu0 %550
  %v553 = vadd.f32 %v469, %v496
  %v554 = vadd.f32 %v470, %v501
  %v555 = vadd.f32 %v471, %v506
  %v556 = vadd.f32 %v472, %v511
  %v557 = vadd.f32 %v473, %v516
  %v558 = vadd.f32 %v474, %v521
  %v559 = vadd.f32 %v475, %v526
  %v560 = vadd.f32 %v476, %v531
  %v561 = vadd.f32 %v477, %v536
  %v562 = vadd.f32 %v478, %v541
  %v563 = vadd.f32 %v479, %v546
  %v564 = vadd.f32 %v480, %v551
  %565 = vst [vmem:[%s4] sm:$0xff] %v553
  %566 = vst [vmem:[%s4 + $0x8] sm:$0xff] %v554
  %567 = vst [vmem:[%s4 + $0x10] sm:$0xff] %v555
  %568 = vst [vmem:[%s4 + $0x18] sm:$0xff] %v556
  %569 = vst [vmem:[%s4 + $0x20] sm:$0xff] %v557
  %570 = vst [vmem:[%s4 + $0x28] sm:$0xff] %v558
  %571 = vst [vmem:[%s4 + $0x30] sm:$0xff] %v559
  %572 = vst [vmem:[%s4 + $0x38] sm:$0xff] %v560
  %573 = vst [vmem:[%s4 + $0x40] sm:$0xff] %v561
  %574 = vst [vmem:[%s4 + $0x48] sm:$0xff] %v562
  %575 = vst [vmem:[%s4 + $0x50] sm:$0xff] %v563
  %576 = vst [vmem:[%s4 + $0x58] sm:$0xff] %v564
  // Predicated region
  $region18: #{mixprop_forward.1} parent=0 // pred_check
    _
  $region19: #{mixprop_forward.1} parent=0 // pred_check_branch
    %578 = sbr.rel (0) target = $region21
  $region20: #{mixprop_forward.1} parent=0 // pred_region
    _
  $region21: #{mixprop_forward.1} parent=0 // pred_fallthru
    _
  // Predicated region
  $region22: #{mixprop_forward.1} parent=0 // pred_check
    _
  $region23: #{mixprop_forward.1} parent=0 // pred_check_branch
    %580 = sbr.rel (0) target = $region25
  $region24: #{mixprop_forward.1} parent=0 // pred_region
    _
  $region25: #{mixprop_forward.1} parent=0 // pred_fallthru
    _

</llo_original>
